<compile_context>
chip_gen: v7x
topology: tpu7x:2x2x1
jax: 0.10.0
libtpu: 0.0.40
codegen_flags: <defaults>
</compile_context>

<pallas_src>
import functools

import jax
import jax.numpy as jnp
from jax import lax
from jax.experimental import pallas as pl
from jax.experimental.pallas import tpu as pltpu


# ----------------------------------------------------------------------------
# In-kernel helpers
# ----------------------------------------------------------------------------
def _decay_mask(H, W):
    """clamp(0.3*y + 0.7*r, 0, 1) on an (H, W) grid, built from iota in-register."""
    hi = lax.broadcasted_iota(jnp.int32, (H, W), 0).astype(jnp.float32)
    wi = lax.broadcasted_iota(jnp.int32, (H, W), 1).astype(jnp.float32)
    y = hi * (1.0 / float(max(H - 1, 1)))              # torch.linspace(0, 1, H)
    x_pos = wi * (2.0 / float(max(W - 1, 1))) - 1.0    # torch.linspace(-1, 1, W)
    r = jnp.sqrt(x_pos * x_pos + (y - 0.5) * (y - 0.5))
    return jnp.clip(0.3 * y + 0.7 * r, 0.0, 1.0)


def _shift_zero(v, d, axis):
    """out[i] = v[i + d] along `axis`, zero padded at the borders (|d| == 1)."""
    size = v.shape[axis]
    shift = (-d) % size                                # non-negative rotate amount
    rolled = pltpu.roll(v, shift, axis)                # rolled[i] = v[(i + d) % size]
    idx = lax.broadcasted_iota(jnp.int32, v.shape, axis)
    valid = jnp.logical_and(idx + d >= 0, idx + d < size)
    return jnp.where(valid, rolled, 0.0)


def _avg_pool3x3(v):
    """F.avg_pool2d(v, 3, stride=1, padding=1) on a 2-D (H, W) value.

    count_include_pad=True (PyTorch default): zero padding, every output divided by 9.
    Computed separably: 3-tap sum along lanes (W), then along sublanes (H).
    """
    row = _shift_zero(v, -1, 1) + v + _shift_zero(v, 1, 1)
    col = _shift_zero(row, -1, 0) + row + _shift_zero(row, 1, 0)
    return col * (1.0 / 9.0)


# ----------------------------------------------------------------------------
# Kernels (one channel per grid step; block = (1, H, W))
# ----------------------------------------------------------------------------
def _noise_blur_kernel(strength, x_ref, n_ref, o_ref):
    _, H, W = x_ref.shape
    x = x_ref[...].astype(jnp.float32).reshape(H, W)       # cast on the vreg, in-kernel
    noise = n_ref[...].astype(jnp.float32).reshape(H, W)
    m = _decay_mask(H, W)
    noisy = x + noise * m * strength
    blurred = _avg_pool3x3(noisy)
    out = (1.0 - m) * noisy + m * blurred
    o_ref[...] = out.reshape(1, H, W).astype(o_ref.dtype)


def _contrast_drop_kernel(x_ref, o_ref):
    _, H, W = x_ref.shape
    x = x_ref[...].astype(jnp.float32).reshape(H, W)
    m = _decay_mask(H, W)
    mean = jnp.sum(x, axis=(0, 1), keepdims=True) * (1.0 / float(H * W))
    out = (1.0 - m) * x + m * mean
    o_ref[...] = out.reshape(1, H, W).astype(o_ref.dtype)


# ----------------------------------------------------------------------------
# Wrapper
# ----------------------------------------------------------------------------
def quality_decay_forward(x, *, strength=0.5, mode="noise_blur", noise=None, key=None):
    """JAX/Pallas equivalent of QualityDecay.forward on a (C, H, W) image.

    In 'noise_blur' mode, `noise` plays the role of torch.randn_like(x); passing the
    same array twice reproduces the module's `set_deterministic()` behaviour.
    """
    C, H, W = x.shape
    block = pl.BlockSpec((1, H, W), lambda c: (c, 0, 0))

    if mode == "noise_blur":
        if noise is None:
            if key is None:
                raise ValueError("noise_blur mode needs `noise` or a PRNG `key`")
            noise = jax.random.normal(key, (C, H, W), dtype=jnp.float32)
        kernel = functools.partial(_noise_blur_kernel, float(strength))
        inputs = (x, noise)
        in_specs = [block, block]
    elif mode == "contrast_drop":
        kernel = _contrast_drop_kernel
        inputs = (x,)
        in_specs = [block]
    else:
        raise ValueError(f"unknown mode: {mode}")

    return pl.pallas_call(
        kernel,
        out_shape=jax.ShapeDtypeStruct((C, H, W), x.dtype),
        grid_spec=pltpu.PrefetchScalarGridSpec(
            num_scalar_prefetch=0,
            grid=(C,),
            in_specs=in_specs,
            out_specs=block,
        ),
        compiler_params=pltpu.CompilerParams(
            dimension_semantics=("parallel",),      # shards channels across v7x's 2 TCs
            vmem_limit_bytes=32 * 1024 * 1024,      # explicit, safe on v5e/v6e/v7x
        ),
    )(*inputs)


# ----------------------------------------------------------------------------
# Pure-JAX reference (same math, no Pallas) for correctness checking
# ----------------------------------------------------------------------------
def _reference_forward(x, *, strength=0.5, mode="noise_blur", noise=None):
    x = x.astype(jnp.float32)
    C, H, W = x.shape
    y = jnp.tile(jnp.linspace(0.0, 1.0, H)[:, None], (1, W))
    x_pos = jnp.tile(jnp.linspace(-1.0, 1.0, W)[None, :], (H, 1))
    r = jnp.sqrt(x_pos ** 2 + (y - 0.5) ** 2)
    mask = jnp.clip(0.3 * y + 0.7 * r, 0.0, 1.0)[None, :, :]
    if mode == "noise_blur":
        xn = x + noise.astype(jnp.float32) * mask * strength
        xp = jnp.pad(xn, ((0, 0), (1, 1), (1, 1)))
        blurred = sum(
            xp[:, dh:dh + H, dw:dw + W] for dh in range(3) for dw in range(3)
        ) / 9.0
        return (1.0 - mask) * xn + mask * blurred
    elif mode == "contrast_drop":
        mean = x.mean(axis=(1, 2), keepdims=True)
        return (1.0 - mask) * x + mask * mean
    raise ValueError(mode)


if __name__ == "__main__":
    key = jax.random.PRNGKey(0)
    kx, kn = jax.random.split(key)
    C, H, W = 4, 16, 16
    x = jax.random.uniform(kx, (C, H, W), dtype=jnp.float32)
    noise = jax.random.normal(kn, (C, H, W), dtype=jnp.float32)

    out_nb = quality_decay_forward(x, strength=0.5, mode="noise_blur", noise=noise)
    out_cd = quality_decay_forward(x, strength=0.5, mode="contrast_drop")
    out_nb, out_cd = jax.block_until_ready((out_nb, out_cd))

    ref_nb = _reference_forward(x, strength=0.5, mode="noise_blur", noise=noise)
    ref_cd = _reference_forward(x, strength=0.5, mode="contrast_drop")

    assert out_nb.shape == x.shape and out_nb.dtype == x.dtype
    assert out_cd.shape == x.shape and out_cd.dtype == x.dtype
    assert jnp.allclose(out_nb, ref_nb, atol=1e-5), "noise_blur mismatch vs reference"
    assert jnp.allclose(out_cd, ref_cd, atol=1e-5), "contrast_drop mismatch vs reference"

    print("KERNEL_OK")
</pallas_src>

<mosaic_0001>
module attributes {stable_mosaic.version = 11 : i64} {
  func.func @_noise_blur_kernel(%arg0: i32, %arg1: memref<1x16x16xf32, #tpu.memory_space<vmem>>, %arg2: memref<1x16x16xf32, #tpu.memory_space<vmem>>, %arg3: memref<1x16x16xf32, #tpu.memory_space<vmem>>) attributes {dimension_semantics = [#tpu.dimension_semantics<parallel>], iteration_bounds = array<i64: 4>, scalar_prefetch = 0 : i64, scratch_operands = 0 : i64, tpu.core_type = #tpu.core_type<tc>, window_params = [{transform_indices = @transform_0, window_bounds = array<i64: 1, 16, 16>}, {transform_indices = @transform_1, window_bounds = array<i64: 1, 16, 16>}, {transform_indices = @transform_2, window_bounds = array<i64: 1, 16, 16>}]} {
    %c0 = arith.constant 0 : index
    %c0_0 = arith.constant 0 : index
    %c0_1 = arith.constant 0 : index
    %0 = vector.load %arg1[%c0, %c0_0, %c0_1] : memref<1x16x16xf32, #tpu.memory_space<vmem>>, vector<1x16x16xf32>
    %1 = vector.shape_cast %0 : vector<1x16x16xf32> to vector<16x16xf32>
    %c0_2 = arith.constant 0 : index
    %c0_3 = arith.constant 0 : index
    %c0_4 = arith.constant 0 : index
    %2 = vector.load %arg2[%c0_2, %c0_3, %c0_4] : memref<1x16x16xf32, #tpu.memory_space<vmem>>, vector<1x16x16xf32>
    %3 = vector.shape_cast %2 : vector<1x16x16xf32> to vector<16x16xf32>
    %4 = tpu.iota {dimensions = array<i32: 0>} : vector<16x16xi32>
    %5 = arith.sitofp %4 : vector<16x16xi32> to vector<16x16xf32>
    %6 = tpu.iota {dimensions = array<i32: 1>} : vector<16x16xi32>
    %7 = arith.sitofp %6 : vector<16x16xi32> to vector<16x16xf32>
    %cst = arith.constant 0.0666666701 : f32
    %8 = vector.broadcast %cst : f32 to vector<16x16xf32>
    %9 = arith.mulf %5, %8 : vector<16x16xf32>
    %cst_5 = arith.constant 0.13333334 : f32
    %10 = vector.broadcast %cst_5 : f32 to vector<16x16xf32>
    %11 = arith.mulf %7, %10 : vector<16x16xf32>
    %cst_6 = arith.constant 1.000000e+00 : f32
    %12 = vector.broadcast %cst_6 : f32 to vector<16x16xf32>
    %13 = arith.subf %11, %12 : vector<16x16xf32>
    %14 = arith.mulf %13, %13 : vector<16x16xf32>
    %cst_7 = arith.constant 5.000000e-01 : f32
    %15 = vector.broadcast %cst_7 : f32 to vector<16x16xf32>
    %16 = arith.subf %9, %15 : vector<16x16xf32>
    %cst_8 = arith.constant 5.000000e-01 : f32
    %17 = vector.broadcast %cst_8 : f32 to vector<16x16xf32>
    %18 = arith.subf %9, %17 : vector<16x16xf32>
    %19 = arith.mulf %16, %18 : vector<16x16xf32>
    %20 = arith.addf %14, %19 : vector<16x16xf32>
    %21 = math.sqrt %20 : vector<16x16xf32>
    %cst_9 = arith.constant 3.000000e-01 : f32
    %22 = vector.broadcast %cst_9 : f32 to vector<16x16xf32>
    %23 = arith.mulf %22, %9 : vector<16x16xf32>
    %cst_10 = arith.constant 0.699999988 : f32
    %24 = vector.broadcast %cst_10 : f32 to vector<16x16xf32>
    %25 = arith.mulf %24, %21 : vector<16x16xf32>
    %26 = arith.addf %23, %25 : vector<16x16xf32>
    %cst_11 = arith.constant 0.000000e+00 : f32
    %cst_12 = arith.constant 1.000000e+00 : f32
    %27 = vector.broadcast %cst_11 : f32 to vector<16x16xf32>
    %28 = arith.maximumf %27, %26 : vector<16x16xf32>
    %29 = vector.broadcast %cst_12 : f32 to vector<16x16xf32>
    %30 = arith.minimumf %29, %28 : vector<16x16xf32>
    %31 = arith.mulf %3, %30 : vector<16x16xf32>
    %cst_13 = arith.constant 5.000000e-01 : f32
    %32 = vector.broadcast %cst_13 : f32 to vector<16x16xf32>
    %33 = arith.mulf %31, %32 : vector<16x16xf32>
    %34 = arith.addf %1, %33 : vector<16x16xf32>
    %c1_i32 = arith.constant 1 : i32
    %35 = tpu.dynamic_rotate %34 by %c1_i32 dim 1 : vector<16x16xf32>, i32 -> vector<16x16xf32>
    %36 = tpu.iota {dimensions = array<i32: 1>} : vector<16x16xi32>
    %c-1_i32 = arith.constant -1 : i32
    %37 = vector.broadcast %c-1_i32 : i32 to vector<16x16xi32>
    %38 = arith.addi %36, %37 : vector<16x16xi32>
    %c0_i32 = arith.constant 0 : i32
    %39 = vector.broadcast %c0_i32 : i32 to vector<16x16xi32>
    %40 = arith.cmpi sge, %38, %39 : vector<16x16xi32>
    %c-1_i32_14 = arith.constant -1 : i32
    %41 = vector.broadcast %c-1_i32_14 : i32 to vector<16x16xi32>
    %42 = arith.addi %36, %41 : vector<16x16xi32>
    %c16_i32 = arith.constant 16 : i32
    %43 = vector.broadcast %c16_i32 : i32 to vector<16x16xi32>
    %44 = arith.cmpi slt, %42, %43 : vector<16x16xi32>
    %45 = arith.andi %40, %44 : vector<16x16xi1>
    %cst_15 = arith.constant 0.000000e+00 : f32
    %46 = vector.broadcast %cst_15 : f32 to vector<16x16xf32>
    %47 = arith.select %45, %35, %46 : vector<16x16xi1>, vector<16x16xf32>
    %48 = arith.addf %47, %34 : vector<16x16xf32>
    %c15_i32 = arith.constant 15 : i32
    %49 = tpu.dynamic_rotate %34 by %c15_i32 dim 1 : vector<16x16xf32>, i32 -> vector<16x16xf32>
    %50 = tpu.iota {dimensions = array<i32: 1>} : vector<16x16xi32>
    %c1_i32_16 = arith.constant 1 : i32
    %51 = vector.broadcast %c1_i32_16 : i32 to vector<16x16xi32>
    %52 = arith.addi %50, %51 : vector<16x16xi32>
    %c0_i32_17 = arith.constant 0 : i32
    %53 = vector.broadcast %c0_i32_17 : i32 to vector<16x16xi32>
    %54 = arith.cmpi sge, %52, %53 : vector<16x16xi32>
    %c1_i32_18 = arith.constant 1 : i32
    %55 = vector.broadcast %c1_i32_18 : i32 to vector<16x16xi32>
    %56 = arith.addi %50, %55 : vector<16x16xi32>
    %c16_i32_19 = arith.constant 16 : i32
    %57 = vector.broadcast %c16_i32_19 : i32 to vector<16x16xi32>
    %58 = arith.cmpi slt, %56, %57 : vector<16x16xi32>
    %59 = arith.andi %54, %58 : vector<16x16xi1>
    %cst_20 = arith.constant 0.000000e+00 : f32
    %60 = vector.broadcast %cst_20 : f32 to vector<16x16xf32>
    %61 = arith.select %59, %49, %60 : vector<16x16xi1>, vector<16x16xf32>
    %62 = arith.addf %48, %61 : vector<16x16xf32>
    %c1_i32_21 = arith.constant 1 : i32
    %63 = tpu.dynamic_rotate %62 by %c1_i32_21 dim 0 : vector<16x16xf32>, i32 -> vector<16x16xf32>
    %64 = tpu.iota {dimensions = array<i32: 0>} : vector<16x16xi32>
    %c-1_i32_22 = arith.constant -1 : i32
    %65 = vector.broadcast %c-1_i32_22 : i32 to vector<16x16xi32>
    %66 = arith.addi %64, %65 : vector<16x16xi32>
    %c0_i32_23 = arith.constant 0 : i32
    %67 = vector.broadcast %c0_i32_23 : i32 to vector<16x16xi32>
    %68 = arith.cmpi sge, %66, %67 : vector<16x16xi32>
    %c-1_i32_24 = arith.constant -1 : i32
    %69 = vector.broadcast %c-1_i32_24 : i32 to vector<16x16xi32>
    %70 = arith.addi %64, %69 : vector<16x16xi32>
    %c16_i32_25 = arith.constant 16 : i32
    %71 = vector.broadcast %c16_i32_25 : i32 to vector<16x16xi32>
    %72 = arith.cmpi slt, %70, %71 : vector<16x16xi32>
    %73 = arith.andi %68, %72 : vector<16x16xi1>
    %cst_26 = arith.constant 0.000000e+00 : f32
    %74 = vector.broadcast %cst_26 : f32 to vector<16x16xf32>
    %75 = arith.select %73, %63, %74 : vector<16x16xi1>, vector<16x16xf32>
    %76 = arith.addf %75, %62 : vector<16x16xf32>
    %c15_i32_27 = arith.constant 15 : i32
    %77 = tpu.dynamic_rotate %62 by %c15_i32_27 dim 0 : vector<16x16xf32>, i32 -> vector<16x16xf32>
    %78 = tpu.iota {dimensions = array<i32: 0>} : vector<16x16xi32>
    %c1_i32_28 = arith.constant 1 : i32
    %79 = vector.broadcast %c1_i32_28 : i32 to vector<16x16xi32>
    %80 = arith.addi %78, %79 : vector<16x16xi32>
    %c0_i32_29 = arith.constant 0 : i32
    %81 = vector.broadcast %c0_i32_29 : i32 to vector<16x16xi32>
    %82 = arith.cmpi sge, %80, %81 : vector<16x16xi32>
    %c1_i32_30 = arith.constant 1 : i32
    %83 = vector.broadcast %c1_i32_30 : i32 to vector<16x16xi32>
    %84 = arith.addi %78, %83 : vector<16x16xi32>
    %c16_i32_31 = arith.constant 16 : i32
    %85 = vector.broadcast %c16_i32_31 : i32 to vector<16x16xi32>
    %86 = arith.cmpi slt, %84, %85 : vector<16x16xi32>
    %87 = arith.andi %82, %86 : vector<16x16xi1>
    %cst_32 = arith.constant 0.000000e+00 : f32
    %88 = vector.broadcast %cst_32 : f32 to vector<16x16xf32>
    %89 = arith.select %87, %77, %88 : vector<16x16xi1>, vector<16x16xf32>
    %90 = arith.addf %76, %89 : vector<16x16xf32>
    %cst_33 = arith.constant 0.111111112 : f32
    %91 = vector.broadcast %cst_33 : f32 to vector<16x16xf32>
    %92 = arith.mulf %90, %91 : vector<16x16xf32>
    %cst_34 = arith.constant 1.000000e+00 : f32
    %93 = vector.broadcast %cst_34 : f32 to vector<16x16xf32>
    %94 = arith.subf %93, %30 : vector<16x16xf32>
    %95 = arith.mulf %94, %34 : vector<16x16xf32>
    %96 = arith.mulf %30, %92 : vector<16x16xf32>
    %97 = arith.addf %95, %96 : vector<16x16xf32>
    %98 = vector.shape_cast %97 : vector<16x16xf32> to vector<1x16x16xf32>
    %c0_35 = arith.constant 0 : index
    %c0_36 = arith.constant 0 : index
    %c0_37 = arith.constant 0 : index
    %99 = vector.load %arg3[%c0_35, %c0_36, %c0_37] : memref<1x16x16xf32, #tpu.memory_space<vmem>>, vector<1x16x16xf32>
    tpu.vector_store %arg3[%c0_35, %c0_36, %c0_37], %98 {strides = array<i32>} : memref<1x16x16xf32, #tpu.memory_space<vmem>>, vector<1x16x16xf32>,
    return
  }
  func.func @transform_0(%arg0: i32) -> (i32, i32, i32) {
    %c0_i32 = arith.constant 0 : i32
    %c0_i32_0 = arith.constant 0 : i32
    %c0_i32_1 = arith.constant 0 : i32
    return %arg0, %c0_i32, %c0_i32_0 : i32, i32, i32
  }
  func.func @transform_1(%arg0: i32) -> (i32, i32, i32) {
    %c0_i32 = arith.constant 0 : i32
    %c0_i32_0 = arith.constant 0 : i32
    %c0_i32_1 = arith.constant 0 : i32
    return %arg0, %c0_i32, %c0_i32_0 : i32, i32, i32
  }
  func.func @transform_2(%arg0: i32) -> (i32, i32, i32) {
    %c0_i32 = arith.constant 0 : i32
    %c0_i32_0 = arith.constant 0 : i32
    %c0_i32_1 = arith.constant 0 : i32
    return %arg0, %c0_i32, %c0_i32_0 : i32, i32, i32
  }
}

</mosaic_0001>

<llo_original>
// kernel: tpu_custom_call.1
$region0: #{tpu_custom_call.1}
  #allocation0 [shape = 'u32[]', space=smem, size = 0x4, offset = 0x4, fixed_abs, tag = 'smem constant byte address 0x4 - core index']
  #allocation1 [shape = 'u32[144,128]{1,0:T(1,128)}', space=vmem, size = 0x12000, scoped, tag = 'internal scratch']
  %s0 = inlined_call_operand.hbm [shape: f32[4,16,16], index: 0, kind: input, shape index: {}]
  %s1 = inlined_call_operand.hbm [shape: f32[4,16,16], index: 1, kind: input, shape index: {}]
  %s2 = inlined_call_operand.hbm [shape: f32[4,16,16], index: 2, kind: output, shape index: {}]
  %s3 = sld [smem:[#allocation0]]
  $region49: #{tpu_custom_call.1} parent=0
    _
  %s5 = ssub.s32 1, %s3
  %s6 = scalar_select 0, %s5, %s3
  $region1: #{tpu_custom_call.1} parent=0
    #allocation2 [shape = 'u8[16384]{0}', space=vmem, size = 0x4000, scoped, tag = 'input window, operand 0']
    #allocation3 [shape = 's32[2]{0}', space=sflag, size = 0x8, scoped, tag = 'scoped memory for tpu_custom_call.1']
    #allocation4 [shape = 's32[2]{0}', space=sflag, size = 0x8, scoped, tag = 'scoped memory for tpu_custom_call.1']
    #allocation5 [shape = 'u8[16384]{0}', space=vmem, size = 0x4000, scoped, tag = 'input window, operand 1']
    #allocation6 [shape = 's32[2]{0}', space=sflag, size = 0x8, scoped, tag = 'scoped memory for tpu_custom_call.1']
    #allocation7 [shape = 'u8[16384]{0}', space=vmem, size = 0x4000, scoped, tag = 'output window, operand 0']
    %7 = vsyncpa [#allocation3], 0
    %s8 = scalar_lea.sflag [#allocation3], 1
    %9 = vsyncpa %s8, 0
    %10 = vsyncpa [#allocation6], 0
    %s11 = scalar_lea.sflag [#allocation6], 1
    %12 = vsyncpa %s11, 0
    %13 = vsyncpa [#allocation4], 0
    %s14 = scalar_lea.sflag [#allocation4], 1
    %15 = vsyncpa %s14, 0
    loop: start=0, step=1, limit=6
    $region2: #{tpu_custom_call.1} parent=1 // loop_pre_header
      _
    $region3: #{tpu_custom_call.1} parent=1 // loop_header
      %s17 = sphi 0, %s21
      %p18 = scmp.ge.s32.totalorder %s17, 6
      %s27 = sphi 0, %s29
      %s30 = sphi 0, %s27
      %s31 = sphi 0, %s30
      %s47 = sphi 0, %s31
      %s53 = sphi 0, %s55
      %s56 = sphi 0, %s53
      %s57 = sphi 0, %s56
      %s73 = sphi 0, %s57
      %s79 = sphi 0, %s81
      %s82 = sphi 0, %s79
      %s83 = sphi 0, %s82
      %s99 = sphi 0, %s83
    $region4: #{tpu_custom_call.1} parent=1 // loop_header_branch
      %20 = sbr.rel (%p18) target = $region8
    $region5: #{tpu_custom_call.1} parent=1 // loop_body
      %s22 = ssub.s32 %s17, 1
      %s23 = ssub.s32 %s17, 2
      %s24 = sadd.s32 %s17, 1
      %s25 = ssub.s32 %s17, %s24
      %p26 = scmp.eq.s32.totalorder %s25, 0
      %s28 = sadd.s32 %s27, 1
      %s29 = scalar_select %p26, %s27, %s28
      %p32 = pneg %p26
      %p33 = scmp.eq.s32.totalorder %s17, 3
      %p34 = por %p32, %p33
      %p35 = scmp.ne.s32.totalorder %s27, %s30
      %p36 = scmp.eq.s32.totalorder %s17, 0
      %p37 = por %p35, %p36
      %p38 = scmp.ne.s32.totalorder %s27, %s30
      %p39 = scmp.eq.s32.totalorder %s22, 3
      %p40 = por %p38, %p39
      %p41 = scmp.ne.s32.totalorder %s30, %s31
      %p42 = scmp.eq.s32.totalorder %s22, 0
      %p43 = por %p41, %p42
      %p44 = scmp.ne.s32.totalorder %s30, %s31
      %p45 = scmp.eq.s32.totalorder %s23, 3
      %p46 = por %p44, %p45
      %p48 = scmp.ne.s32.totalorder %s31, %s47
      %p49 = scmp.eq.s32.totalorder %s23, 0
      %p50 = por %p48, %p49
      %s51 = ssub.s32 %s17, %s24
      %p52 = scmp.eq.s32.totalorder %s51, 0
      %s54 = sadd.s32 %s53, 1
      %s55 = scalar_select %p52, %s53, %s54
      %p58 = pneg %p52
      %p59 = scmp.eq.s32.totalorder %s17, 3
      %p60 = por %p58, %p59
      %p61 = scmp.ne.s32.totalorder %s53, %s56
      %p62 = scmp.eq.s32.totalorder %s17, 0
      %p63 = por %p61, %p62
      %p64 = scmp.ne.s32.totalorder %s53, %s56
      %p65 = scmp.eq.s32.totalorder %s22, 3
      %p66 = por %p64, %p65
      %p67 = scmp.ne.s32.totalorder %s56, %s57
      %p68 = scmp.eq.s32.totalorder %s22, 0
      %p69 = por %p67, %p68
      %p70 = scmp.ne.s32.totalorder %s56, %s57
      %p71 = scmp.eq.s32.totalorder %s23, 3
      %p72 = por %p70, %p71
      %p74 = scmp.ne.s32.totalorder %s57, %s73
      %p75 = scmp.eq.s32.totalorder %s23, 0
      %p76 = por %p74, %p75
      %s77 = ssub.s32 %s17, %s24
      %p78 = scmp.eq.s32.totalorder %s77, 0
      %s80 = sadd.s32 %s79, 1
      %s81 = scalar_select %p78, %s79, %s80
      %p84 = pneg %p78
      %p85 = scmp.eq.s32.totalorder %s17, 3
      %p86 = por %p84, %p85
      %p87 = scmp.ne.s32.totalorder %s79, %s82
      %p88 = scmp.eq.s32.totalorder %s17, 0
      %p89 = por %p87, %p88
      %p90 = scmp.ne.s32.totalorder %s79, %s82
      %p91 = scmp.eq.s32.totalorder %s22, 3
      %p92 = por %p90, %p91
      %p93 = scmp.ne.s32.totalorder %s82, %s83
      %p94 = scmp.eq.s32.totalorder %s22, 0
      %p95 = por %p93, %p94
      %p96 = scmp.ne.s32.totalorder %s82, %s83
      %p97 = scmp.eq.s32.totalorder %s23, 3
      %p98 = por %p96, %p97
      %p100 = scmp.ne.s32.totalorder %s83, %s99
      %p101 = scmp.eq.s32.totalorder %s23, 0
      %p102 = por %p100, %p101
      %p103 = scmp.le.s32.totalorder 1, %s17
      %p104 = scmp.lt.s32.totalorder %s17, 5
      %p105 = pnand %p103, %p104
      %p106 = pneg %p105
      // Predicated region
      $region9: #{tpu_custom_call.1} parent=5 // pred_check
        _
      $region10: #{tpu_custom_call.1} parent=5 // pred_check_branch
        %108 = sbr.rel (%p105) target = $region12
      $region11: #{tpu_custom_call.1} parent=5 // pred_region
        %s109 = ssub.s32 %s17, 1
      $region12: #{tpu_custom_call.1} parent=5 // pred_fallthru
        _
      %p110 = scmp.lt.s32.totalorder %s17, 4
      // Predicated region
      $region13: #{tpu_custom_call.1} parent=5 // pred_check
        %p111 = pneg %p110
      $region14: #{tpu_custom_call.1} parent=5 // pred_check_branch
        %113 = sbr.rel (%p111) target = $region16
      $region15: #{tpu_custom_call.1} parent=5 // pred_region
        // Predicated region
        $region17: #{tpu_custom_call.1} parent=15 // pred_check
          %p114 = pneg %p37
        $region18: #{tpu_custom_call.1} parent=15 // pred_check_branch
          %116 = sbr.rel (%p114) target = $region20
        $region19: #{tpu_custom_call.1} parent=15 // pred_region
          %s117 = sand.u32 %s27, 1
          %s118 = scalar_lea.sflag [#allocation3], %s117
          %s119 = sand.u32 %s27, 1
          %s120 = smul.addr %s119, 16
          %s121 = scalar_lea.vmem [#allocation2], %s120
          %s123 = ssub.s32 256, 256
          %124 = vsyncadd %s118, %s123
          %s125 = smul.addr %s17, 2
          %s126 = smul.addr %s125, 128
          %s127 = scalar_lea.hbm %s0, %s126
          %s128 = sshll.u32 %s121, 4
          %s129 = int_to_ptr.vmem [resolvable:$true] %s128
          %134 = dma.hbm_to_vmem [thread:$0]  %s127, 256, %s129, %s118, 128, 128, 8
        $region20: #{tpu_custom_call.1} parent=15 // pred_fallthru
          _
        // Predicated region
        $region21: #{tpu_custom_call.1} parent=15 // pred_check
          %p135 = pneg %p63
        $region22: #{tpu_custom_call.1} parent=15 // pred_check_branch
          %137 = sbr.rel (%p135) target = $region24
        $region23: #{tpu_custom_call.1} parent=15 // pred_region
          %s138 = sand.u32 %s53, 1
          %s139 = scalar_lea.sflag [#allocation6], %s138
          %s140 = sand.u32 %s53, 1
          %s141 = smul.addr %s140, 16
          %s142 = scalar_lea.vmem [#allocation5], %s141
          %s144 = ssub.s32 256, 256
          %145 = vsyncadd %s139, %s144
          %s146 = smul.addr %s17, 2
          %s147 = smul.addr %s146, 128
          %s148 = scalar_lea.hbm %s1, %s147
          %s149 = sshll.u32 %s142, 4
          %s150 = int_to_ptr.vmem [resolvable:$true] %s149
          %155 = dma.hbm_to_vmem [thread:$0]  %s148, 256, %s150, %s139, 128, 128, 8
        $region24: #{tpu_custom_call.1} parent=15 // pred_fallthru
          _
      $region16: #{tpu_custom_call.1} parent=5 // pred_fallthru
        _
      %p156 = scmp.le.s32.totalorder 1, %s17
      %p157 = scmp.lt.s32.totalorder %s17, 5
      %p158 = pnand %p156, %p157
      %p159 = pneg %p158
      // Predicated region
      $region25: #{tpu_custom_call.1} parent=5 // pred_check
        _
      $region26: #{tpu_custom_call.1} parent=5 // pred_check_branch
        %161 = sbr.rel (%p158) target = $region28
      $region27: #{tpu_custom_call.1} parent=5 // pred_region
        %s162 = ssub.s32 %s17, 1
        %s163 = sand.u32 %s30, 1
        %s164 = scalar_lea.sflag [#allocation3], %s163
        %s165 = sand.u32 %s30, 1
        %s166 = smul.addr %s165, 16
        %s167 = scalar_lea.vmem [#allocation2], %s166
        // Predicated region
        $region29: #{tpu_custom_call.1} parent=27 // pred_check
          %p168 = pneg %p43
        $region30: #{tpu_custom_call.1} parent=27 // pred_check_branch
          %170 = sbr.rel (%p168) target = $region32
        $region31: #{tpu_custom_call.1} parent=27 // pred_region
          %171 = dma.done %s164, 256
        $region32: #{tpu_custom_call.1} parent=27 // pred_fallthru
          _
        %s172 = sand.u32 %s56, 1
        %s173 = scalar_lea.sflag [#allocation6], %s172
        %s174 = sand.u32 %s56, 1
        %s175 = smul.addr %s174, 16
        %s176 = scalar_lea.vmem [#allocation5], %s175
        // Predicated region
        $region33: #{tpu_custom_call.1} parent=27 // pred_check
          %p177 = pneg %p69
        $region34: #{tpu_custom_call.1} parent=27 // pred_check_branch
          %179 = sbr.rel (%p177) target = $region36
        $region35: #{tpu_custom_call.1} parent=27 // pred_region
          %180 = dma.done %s173, 256
        $region36: #{tpu_custom_call.1} parent=27 // pred_fallthru
          _
        %s181 = sand.u32 %s30, 1
        %s182 = scalar_lea.sflag [#allocation3], %s181
        %s183 = sand.u32 %s30, 1
        %s184 = smul.addr %s183, 16
        %s185 = scalar_lea.vmem [#allocation2], %s184
        %p186 = pneg %p43
        %p187 = pneg %p40
        %s188 = sand.u32 %s56, 1
        %s189 = scalar_lea.sflag [#allocation6], %s188
        %s190 = sand.u32 %s56, 1
        %s191 = smul.addr %s190, 16
        %s192 = scalar_lea.vmem [#allocation5], %s191
        %p193 = pneg %p69
        %p194 = pneg %p66
        %p195 = pneg %p95
        %p196 = pneg %p92
        %s197 = sand.u32 %s82, 1
        %s198 = scalar_lea.sflag [#allocation4], %s197
        %s199 = sand.u32 %s82, 1
        %s200 = smul.addr %s199, 16
        %s201 = scalar_lea.vmem [#allocation7], %s200
        %v202 = vld [vmem:[%s167] sm:$0xff]
        %v203 = vld [vmem:[%s167 + $0x8] sm:$0xff]
        %v204 = vld [vmem:[%s176] sm:$0xff]
        %v205 = vld [vmem:[%s176 + $0x8] sm:$0xff]
        %v206 = vlaneseq
        %v207 = vshrl.u32 %v206, 7
        %v208 = vadd.s32 %v207, 8
        %v209 = vcvt.s32.f32 %v207
        %v210 = vcvt.s32.f32 %v208
        %v211 = vlaneseq
        %v212 = vand.u32 %v211, 127
        %v213 = vcvt.s32.f32 %v212
        %v214 = vmul.f32 %v209, 0.06666667
        %v215 = vmul.f32 %v210, 0.06666667
        %v216 = vmul.f32 %v213, 0.13333334
        %v217 = vsub.f32 %v216, 1.0
        %v218 = vmul.f32 %v217, %v217
        %v219 = vsub.f32 %v214, 0.5
        %v220 = vsub.f32 %v215, 0.5
        %v221 = vmul.f32 %v219, %v219
        %v222 = vmul.f32 %v220, %v220
        %v223 = vadd.f32 %v218, %v221
        %v224 = vadd.f32 %v218, %v222
        %v225 = vrsqrt.pop %v223
        %v226 = vmul.f32 %v223, %v225
        %vm227 = vcmp.eq.f32.partialorder %v223, inf
        %v228 = vsel %vm227, %v223, %v226
        %vm229 = vcmp.eq.f32.partialorder %v223, 0.0
        %v230 = vand.u32 %v223, 2147483648
        %v231 = vsel %vm229, %v230, %v228
        %v232 = vrsqrt.pop %v224
        %v233 = vmul.f32 %v224, %v232
        %vm234 = vcmp.eq.f32.partialorder %v224, inf
        %v235 = vsel %vm234, %v224, %v233
        %vm236 = vcmp.eq.f32.partialorder %v224, 0.0
        %v237 = vand.u32 %v224, 2147483648
        %v238 = vsel %vm236, %v237, %v235
        %v239 = vmul.f32 %v214, 0.3
        %v240 = vmul.f32 %v215, 0.3
        %v241 = vmul.f32 %v231, 0.7
        %v242 = vmul.f32 %v238, 0.7
        %v243 = vadd.f32 %v239, %v241
        %v244 = vadd.f32 %v240, %v242
        %v245 = vmax.f32 %v243, 0.0
        %v246 = vmax.f32 %v244, 0.0
        %v247 = vmin.f32 %v245, 1.0
        %v248 = vmin.f32 %v246, 1.0
        %v249 = vmul.f32 %v204, %v247
        %v250 = vmul.f32 %v205, %v248
        %v251 = vmul.f32 %v249, 0.5
        %v252 = vmul.f32 %v250, 0.5
        %v253 = vadd.f32 %v202, %v251
        %v254 = vadd.f32 %v203, %v252
        %vm255 = vcmask 1047680
        %256 = vrot.lane.b32.xlu0 %v253, 16
        %v257 = vpop.permute.xlu0 %256
        %v258 = vsel %vm255, %v257, %v253
        %259 = vrot.lane.b32.xlu0 %v254, 16
        %v260 = vpop.permute.xlu0 %259
        %v261 = vsel %vm255, %v260, %v254
        %262 = vrot.lane.b32.xlu0 %v258, 16
        %v263 = vpop.permute.xlu0 %262
        %264 = vrot.lane.b32.xlu0 %v261, 16
        %v265 = vpop.permute.xlu0 %264
        %v266 = vsel %vm255, %v263, %v253
        %v267 = vsel %vm255, %v265, %v254
        %v268 = vadd.s32 %v212, 4294967295
        %vm269 = vcmp.ge.s32.totalorder %v268, 0
        %vm270 = vcmp.lt.s32.totalorder %v268, 16
        %vm271 = vmand %vm269, %vm270
        %274 = vrot.lane.b32.xlu0 %v266, 113
        %v275 = vpop.permute.xlu0 %274
        %276 = vrot.lane.b32.xlu0 %v267, 113
        %v277 = vpop.permute.xlu0 %276
        %v280 = vsel %vm271, %v275, 0.0
        %v281 = vsel %vm271, %v277, 0.0
        %v282 = vadd.f32 %v280, %v253
        %v283 = vadd.f32 %v281, %v254
        %v284 = vadd.s32 %v212, 1
        %vm285 = vcmp.ge.s32.totalorder %v284, 0
        %vm286 = vcmp.lt.s32.totalorder %v284, 16
        %vm287 = vmand %vm285, %vm286
        %288 = vrot.lane.b32.xlu0 %v266, 127
        %v289 = vpop.permute.xlu0 %288
        %290 = vrot.lane.b32.xlu0 %v267, 127
        %v291 = vpop.permute.xlu0 %290
        %v294 = vsel %vm287, %v289, 0.0
        %v295 = vsel %vm287, %v291, 0.0
        %v296 = vadd.f32 %v282, %v294
        %v297 = vadd.f32 %v283, %v295
        %v298 = vrot.slane %v296, 7
        %v299 = vrot.slane %v297, 7
        %vm300 = vcmp.lt.s32.totalorder %v207, 1
        %v301 = vsel %vm300, %v298, %v299
        %v302 = vsel %vm300, %v299, %v298
        %v303 = vadd.s32 %v207, 4294967295
        %v304 = vadd.s32 %v208, 4294967295
        %vm305 = vcmp.ge.s32.totalorder %v303, 0
        %vm306 = vcmp.ge.s32.totalorder %v304, 0
        %vm307 = vcmp.lt.s32.totalorder %v303, 16
        %vm308 = vcmp.lt.s32.totalorder %v304, 16
        %vm309 = vmand %vm305, %vm307
        %vm310 = vmand %vm306, %vm308
        %v311 = vsel %vm309, %v302, 0.0
        %v312 = vsel %vm310, %v301, 0.0
        %v313 = vadd.f32 %v311, %v296
        %v314 = vadd.f32 %v312, %v297
        %v315 = vrot.slane %v296, 1
        %v316 = vrot.slane %v297, 1
        %vm317 = vcmp.lt.s32.totalorder %v207, 7
        %v318 = vsel %vm317, %v315, %v316
        %v319 = vsel %vm317, %v316, %v315
        %v320 = vadd.s32 %v207, 1
        %v321 = vadd.s32 %v208, 1
        %vm322 = vcmp.ge.s32.totalorder %v320, 0
        %vm323 = vcmp.ge.s32.totalorder %v321, 0
        %vm324 = vcmp.lt.s32.totalorder %v320, 16
        %vm325 = vcmp.lt.s32.totalorder %v321, 16
        %vm326 = vmand %vm322, %vm324
        %vm327 = vmand %vm323, %vm325
        %v328 = vsel %vm326, %v318, 0.0
        %v329 = vsel %vm327, %v319, 0.0
        %v330 = vadd.f32 %v313, %v328
        %v331 = vadd.f32 %v314, %v329
        %v332 = vmul.f32 %v330, 0.11111111
        %v333 = vmul.f32 %v331, 0.11111111
        %v334 = vsub.f32 1.0, %v247
        %v335 = vsub.f32 1.0, %v248
        %v336 = vmul.f32 %v334, %v253
        %v337 = vmul.f32 %v335, %v254
        %v338 = vmul.f32 %v247, %v332
        %v339 = vmul.f32 %v248, %v333
        %v340 = vadd.f32 %v336, %v338
        %v341 = vadd.f32 %v337, %v339
        %vm342 = vcmask 130048
        %343 = vst.msk [vmem:[%s201] sm:$0xff] %vm342, %v340
        %344 = vst.msk [vmem:[%s201 + $0x8] sm:$0xff] %vm342, %v341
        %s345 = sand.u32 %s82, 1
        %s346 = scalar_lea.sflag [#allocation4], %s345
        %s347 = sand.u32 %s82, 1
        %s348 = smul.addr %s347, 16
        %s349 = scalar_lea.vmem [#allocation7], %s348
        // Predicated region
        $region37: #{tpu_custom_call.1} parent=27 // pred_check
          %p350 = pneg %p92
        $region38: #{tpu_custom_call.1} parent=27 // pred_check_branch
          %352 = sbr.rel (%p350) target = $region40
        $region39: #{tpu_custom_call.1} parent=27 // pred_region
          %s354 = ssub.s32 256, 256
          %355 = vsyncadd %s346, %s354
          %s356 = smul.addr %s22, 2
          %s357 = smul.addr %s356, 128
          %s358 = scalar_lea.hbm %s2, %s357
          %s359 = sshll.u32 %s349, 4
          %s360 = int_to_ptr.vmem [resolvable:$true] %s359
          %365 = dma.vmem_to_hbm [thread:$0]  %s360, 256, %s358, %s346, 128, 128, 8
        $region40: #{tpu_custom_call.1} parent=27 // pred_fallthru
          _
      $region28: #{tpu_custom_call.1} parent=5 // pred_fallthru
        _
      %p366 = scmp.le.s32.totalorder 2, %s17
      // Predicated region
      $region41: #{tpu_custom_call.1} parent=5 // pred_check
        %p367 = pneg %p366
      $region42: #{tpu_custom_call.1} parent=5 // pred_check_branch
        %369 = sbr.rel (%p367) target = $region44
      $region43: #{tpu_custom_call.1} parent=5 // pred_region
        %s370 = ssub.s32 %s17, 2
        // Predicated region
        $region45: #{tpu_custom_call.1} parent=43 // pred_check
          %p371 = pneg %p98
        $region46: #{tpu_custom_call.1} parent=43 // pred_check_branch
          %373 = sbr.rel (%p371) target = $region48
        $region47: #{tpu_custom_call.1} parent=43 // pred_region
          %s374 = sand.u32 %s83, 1
          %s375 = scalar_lea.sflag [#allocation4], %s374
          %s376 = sand.u32 %s83, 1
          %s377 = smul.addr %s376, 16
          %s378 = scalar_lea.vmem [#allocation7], %s377
          %379 = dma.done %s375, 256
        $region48: #{tpu_custom_call.1} parent=43 // pred_fallthru
          _
      $region44: #{tpu_custom_call.1} parent=5 // pred_fallthru
        _
    $region6: #{tpu_custom_call.1} parent=1 // loop_footer
      %s21 = sadd.s32 1, %s17
    $region7: #{tpu_custom_call.1} parent=1 // loop_footer_branch
      %16 = sbr.rel target = $region3
    $region8: #{tpu_custom_call.1} parent=1 // loop_exit
      _
    %380 = vsyncpa [#allocation3], 1
    %s381 = scalar_lea.sflag [#allocation3], 1
    %382 = vsyncpa %s381, 1
    %383 = vsyncpa [#allocation6], 1
    %s384 = scalar_lea.sflag [#allocation6], 1
    %385 = vsyncpa %s384, 1
    %386 = vsyncpa [#allocation4], 1
    %s387 = scalar_lea.sflag [#allocation4], 1
    %388 = vsyncpa %s387, 1

</llo_original>
